<compile_context>
chip_gen: v7x
topology: tpu7x:2x2x1
jax: 0.10.0
libtpu: 0.0.40
codegen_flags: <defaults>
</compile_context>

<pallas_src>
import functools
import math

import jax
import jax.numpy as jnp
import numpy as np
from jax.experimental import pallas as pl
from jax.experimental.pallas import tpu as pltpu


_VMEM_BLOCK_BUDGET = 12 * 1024 * 1024   # bytes for double-buffered I/O blocks + intermediates
_VMEM_LIMIT_BYTES = 32 * 1024 * 1024    # explicit scoped-VMEM limit (safe on v5e/v6e/v7x)


# ----------------------------------------------------------------------------
# Interpolation matrices (glue, host-side numpy).
# ----------------------------------------------------------------------------
def _interp_matrix_align_corners(out_size: int, in_size: int) -> jnp.ndarray:
    """(out_size, in_size) bilinear interpolation matrix, align_corners=True."""
    if out_size == 1 or in_size == 1:
        src = np.zeros((out_size,), dtype=np.float64)
    else:
        src = np.arange(out_size, dtype=np.float64) * (in_size - 1) / (out_size - 1)
    i0 = np.clip(np.floor(src).astype(np.int64), 0, in_size - 1)
    i1 = np.clip(i0 + 1, 0, in_size - 1)
    frac = src - i0
    a = np.zeros((out_size, in_size), dtype=np.float64)
    a[np.arange(out_size), i0] += 1.0 - frac
    a[np.arange(out_size), i1] += frac
    return jnp.asarray(a, dtype=jnp.float32)


def _largest_divisor_leq(n: int, cap: int) -> int:
    cap = max(1, min(n, cap))
    for d in range(cap, 0, -1):
        if n % d == 0:
            return d
    return 1


# ----------------------------------------------------------------------------
# Kernel bodies.
# ----------------------------------------------------------------------------
def _upsample_block(x, ah, awt):
    """x: (TB, H_in, W_in) f32; ah: (H_out, H_in); awt: (W_in, W_out) -> (TB, H_out, W_out) f32."""
    tb, h_in, w_in = x.shape
    h_out = ah.shape[0]
    w_out = awt.shape[1]
    if h_in % 8 == 0:
        # W-interp as ONE large MXU matmul: M = TB*H_in fills MXU rows.
        t = jnp.dot(x.reshape(tb * h_in, w_in), awt,
                    preferred_element_type=jnp.float32).reshape(tb, h_in, w_out)
    else:
        # Batched fallback (avoids a sublane-crossing reshape for odd H_in).
        awt_b = jnp.broadcast_to(awt, (tb, w_in, w_out))
        t = jax.lax.dot_general(x, awt_b, (((2,), (1,)), ((0,), (0,))),
                                preferred_element_type=jnp.float32)
    # H-interp as a batched matmul over the TB axis ('Hh,bhw->bHw').
    ah_b = jnp.broadcast_to(ah, (tb, h_out, h_in))
    out = jax.lax.dot_general(ah_b, t, (((2,), (1,)), ((0,), (0,))),
                              preferred_element_type=jnp.float32)
    return out


def _upsample_kernel(x_ref, ah_ref, awt_ref, o_ref):
    x = x_ref[...].astype(jnp.float32)
    o_ref[...] = _upsample_block(x, ah_ref[...], awt_ref[...]).astype(o_ref.dtype)


def _fused_kernel(x_ref, skip_ref, ah_ref, awt_ref, o_ref, *, jx):
    """Grid (n, j): j < jx -> upsample an x block; j >= jx -> copy a skip block."""
    j = pl.program_id(1)

    @pl.when(j < jx)
    def _upsample():
        x = x_ref[...].astype(jnp.float32)
        o_ref[...] = _upsample_block(x, ah_ref[...], awt_ref[...]).astype(o_ref.dtype)

    @pl.when(j >= jx)
    def _copy_skip():
        o_ref[...] = skip_ref[...].astype(o_ref.dtype)


# ----------------------------------------------------------------------------
# Wrappers.
# ----------------------------------------------------------------------------
def bilinear_upsample_align_corners(x: jnp.ndarray, out_h: int, out_w: int) -> jnp.ndarray:
    """x: (N, C, H, W) -> (N, C, out_h, out_w), bilinear, align_corners=True."""
    n, c, h_in, w_in = x.shape
    h_out, w_out = int(out_h), int(out_w)
    rows = n * c

    a_h = _interp_matrix_align_corners(h_out, h_in)                     # (H_out, H_in)
    a_w_t = jnp.transpose(_interp_matrix_align_corners(w_out, w_in))    # (W_in, W_out)

    esz = jnp.dtype(x.dtype).itemsize
    row_bytes = (2 * esz * (h_in * w_in + h_out * w_out)                      # dbl-buffered blocks
                 + 4 * (h_in * w_out + h_out * h_in + h_out * w_out))         # f32 intermediates
    tb = max(1, min(rows, 128, _VMEM_BLOCK_BUDGET // max(1, row_bytes)))
    if rows >= 2:                                   # keep >= 2 grid steps (v7x: 2 TensorCores)
        tb = min(tb, pl.cdiv(rows, 2))
    grid = (pl.cdiv(rows, tb),)

    x_flat = x.reshape(rows, h_in, w_in)

    out_flat = pl.pallas_call(
        _upsample_kernel,
        out_shape=jax.ShapeDtypeStruct((rows, h_out, w_out), x.dtype),
        grid=grid,
        in_specs=[
            pl.BlockSpec((tb, h_in, w_in), lambda i: (i, 0, 0)),
            pl.BlockSpec((h_out, h_in), lambda i: (0, 0)),   # resident (constant block index)
            pl.BlockSpec((w_in, w_out), lambda i: (0, 0)),   # resident
        ],
        out_specs=pl.BlockSpec((tb, h_out, w_out), lambda i: (i, 0, 0)),
        compiler_params=pltpu.CompilerParams(
            dimension_semantics=("parallel",),
            vmem_limit_bytes=_VMEM_LIMIT_BYTES),
    )(x_flat, a_h, a_w_t)

    return out_flat.reshape(n, c, h_out, w_out)


def bilinear_upsample_concat(x: jnp.ndarray, skip: jnp.ndarray) -> jnp.ndarray:
    """Fused: upsample x to skip's spatial size and concat along channels, one HBM pass."""
    n, c_x, h_in, w_in = x.shape
    n2, c_s, h_out, w_out = skip.shape
    assert n == n2, (x.shape, skip.shape)

    esz = jnp.dtype(x.dtype).itemsize
    row_bytes = (2 * esz * (h_in * w_in + 2 * h_out * w_out)
                 + 4 * (h_in * w_out + h_out * h_in + h_out * w_out))
    cap = max(1, min(128, _VMEM_BLOCK_BUDGET // max(1, row_bytes)))
    # TB must divide both C_x and C_skip so no block straddles the x/skip boundary.
    tb = _largest_divisor_leq(math.gcd(c_x, c_s), cap)
    if tb < 2:
        # Degenerate channel counts: fall back to the (still batched) upsample + concat.
        up = bilinear_upsample_align_corners(x, h_out, w_out)
        return jnp.concatenate([up, skip], axis=1)

    jx = c_x // tb          # number of x blocks per batch element
    js = c_s // tb          # number of skip blocks per batch element
    jt = jx + js
    c_total = c_x + c_s

    a_h = _interp_matrix_align_corners(h_out, h_in)
    a_w_t = jnp.transpose(_interp_matrix_align_corners(w_out, w_in))

    x_flat = x.reshape(n * c_x, h_in, w_in)
    skip_flat = skip.reshape(n * c_s, h_out, w_out)

    # Index maps clamp the unused operand to an already-resident block -> no wasted DMA.
    def x_map(nn, j):
        return (nn * jx + jnp.minimum(j, jx - 1), 0, 0)

    def skip_map(nn, j):
        return (nn * js + jnp.maximum(j - jx, 0), 0, 0)

    def const_map(nn, j):
        return (0, 0)

    def out_map(nn, j):
        return (nn * jt + j, 0, 0)

    kernel = functools.partial(_fused_kernel, jx=jx)

    out_flat = pl.pallas_call(
        kernel,
        out_shape=jax.ShapeDtypeStruct((n * c_total, h_out, w_out), x.dtype),
        grid=(n, jt),
        in_specs=[
            pl.BlockSpec((tb, h_in, w_in), x_map),
            pl.BlockSpec((tb, h_out, w_out), skip_map),
            pl.BlockSpec((h_out, h_in), const_map),
            pl.BlockSpec((w_in, w_out), const_map),
        ],
        out_specs=pl.BlockSpec((tb, h_out, w_out), out_map),
        compiler_params=pltpu.CompilerParams(
            dimension_semantics=("parallel", "parallel"),
            vmem_limit_bytes=_VMEM_LIMIT_BYTES),
    )(x_flat, skip_flat, a_h, a_w_t)

    return out_flat.reshape(n, c_total, h_out, w_out)


class TransitionUp:
    """Pallas/JAX port of TransitionUp (no learned parameters)."""

    def __init__(self, in_channels=None, out_channels=None):
        # The PyTorch module ignores these; kept for API parity.
        del in_channels, out_channels

    def __call__(self, x, skip, concat=True):
        is_v2 = isinstance(skip, list)
        skip_x = skip[0] if is_v2 else skip
        out_h, out_w = skip_x.shape[2], skip_x.shape[3]

        if concat and not is_v2:
            # Fused upsample + channel concat (single HBM pass).
            return bilinear_upsample_concat(x, skip)

        out = bilinear_upsample_align_corners(x, out_h, out_w)
        if concat and is_v2:
            return [out] + skip          # v2 path: python list concat (pure glue)
        return out


# ----------------------------------------------------------------------------
# Reference + test.
# ----------------------------------------------------------------------------
def _ref_bilinear_align_corners(x, out_h, out_w):
    """Independent gather-based numpy reference of F.interpolate(..., 'bilinear', align_corners=True)."""
    x = np.asarray(x, dtype=np.float64)
    n, c, h, w = x.shape
    ys = np.zeros(out_h) if (out_h == 1 or h == 1) else np.arange(out_h) * (h - 1) / (out_h - 1)
    xs = np.zeros(out_w) if (out_w == 1 or w == 1) else np.arange(out_w) * (w - 1) / (out_w - 1)
    y0 = np.clip(np.floor(ys).astype(int), 0, h - 1); y1 = np.clip(y0 + 1, 0, h - 1)
    x0 = np.clip(np.floor(xs).astype(int), 0, w - 1); x1 = np.clip(x0 + 1, 0, w - 1)
    wy = (ys - y0)[None, None, :, None]
    wx = (xs - x0)[None, None, None, :]
    top = x[:, :, y0][:, :, :, x0] * (1 - wx) + x[:, :, y0][:, :, :, x1] * wx
    bot = x[:, :, y1][:, :, :, x0] * (1 - wx) + x[:, :, y1][:, :, :, x1] * wx
    return top * (1 - wy) + bot * wy


if __name__ == "__main__":
    key = jax.random.PRNGKey(0)
    kx, ks = jax.random.split(key)

    # Small shapes consistent with the module: x is upsampled to skip's (H, W).
    x = jax.random.normal(kx, (2, 4, 8, 8), dtype=jnp.float32)
    skip = jax.random.normal(ks, (2, 4, 16, 16), dtype=jnp.float32)

    mod = TransitionUp(4, 4)

    # Main path: fused upsample + concat kernel.
    out = jax.block_until_ready(mod(x, skip, concat=True))
    assert out.shape == (2, 8, 16, 16), out.shape

    ref_up = _ref_bilinear_align_corners(np.asarray(x), 16, 16)
    ref = np.concatenate([ref_up, np.asarray(skip, dtype=np.float64)], axis=1)
    np.testing.assert_allclose(np.asarray(out, dtype=np.float64), ref, rtol=1e-5, atol=1e-5)

    # concat=False path: plain batched upsample kernel.
    out_nc = jax.block_until_ready(mod(x, skip, concat=False))
    assert out_nc.shape == (2, 4, 16, 16), out_nc.shape
    np.testing.assert_allclose(np.asarray(out_nc, dtype=np.float64), ref_up, rtol=1e-5, atol=1e-5)

    # v2 (list skip) path — list concat is pure glue.
    out_v2 = mod(x, [skip], concat=True)
    jax.block_until_ready(out_v2[0])
    assert isinstance(out_v2, list) and out_v2[0].shape == (2, 4, 16, 16)
    np.testing.assert_allclose(np.asarray(out_v2[0], dtype=np.float64), ref_up, rtol=1e-5, atol=1e-5)

    print("KERNEL_OK")
</pallas_src>

<mosaic_0001>
module attributes {stable_mosaic.version = 11 : i64} {
  func.func @_fused_kernel(%arg0: i32, %arg1: i32, %arg2: memref<4x8x8xf32, #tpu.memory_space<vmem>>, %arg3: memref<4x16x16xf32, #tpu.memory_space<vmem>>, %arg4: memref<16x8xf32, #tpu.memory_space<vmem>>, %arg5: memref<8x16xf32, #tpu.memory_space<vmem>>, %arg6: memref<4x16x16xf32, #tpu.memory_space<vmem>>) attributes {dimension_semantics = [#tpu.dimension_semantics<parallel>, #tpu.dimension_semantics<parallel>], iteration_bounds = array<i64: 2, 2>, scalar_prefetch = 0 : i64, scratch_operands = 0 : i64, tpu.core_type = #tpu.core_type<tc>, window_params = [{transform_indices = @transform_0, window_bounds = array<i64: 4, 8, 8>}, {transform_indices = @transform_1, window_bounds = array<i64: 4, 16, 16>}, {pipeline_mode = #tpu.pipeline_mode<synchronous>, transform_indices = @transform_2, window_bounds = array<i64: 16, 8>}, {pipeline_mode = #tpu.pipeline_mode<synchronous>, transform_indices = @transform_3, window_bounds = array<i64: 8, 16>}, {transform_indices = @transform_4, window_bounds = array<i64: 4, 16, 16>}]} {
    %c1_i32 = arith.constant 1 : i32
    %0 = arith.cmpi slt, %arg1, %c1_i32 : i32
    %1 = arith.extui %0 : i1 to i32
    %c0_i32 = arith.constant 0 : i32
    %2 = arith.cmpi ne, %1, %c0_i32 : i32
    scf.if %2 {
      %c0 = arith.constant 0 : index
      %c0_2 = arith.constant 0 : index
      %c0_3 = arith.constant 0 : index
      %6 = vector.load %arg2[%c0, %c0_2, %c0_3] : memref<4x8x8xf32, #tpu.memory_space<vmem>>, vector<4x8x8xf32>
      %c0_4 = arith.constant 0 : index
      %c0_5 = arith.constant 0 : index
      %7 = vector.load %arg4[%c0_4, %c0_5] : memref<16x8xf32, #tpu.memory_space<vmem>>, vector<16x8xf32>
      %c0_6 = arith.constant 0 : index
      %c0_7 = arith.constant 0 : index
      %8 = vector.load %arg5[%c0_6, %c0_7] : memref<8x16xf32, #tpu.memory_space<vmem>>, vector<8x16xf32>
      %9 = vector.shape_cast %6 : vector<4x8x8xf32> to vector<32x8xf32>
      %cst = arith.constant dense<0.000000e+00> : vector<32x16xf32>
      %10 = tpu.matmul %9, %8, %cst {dimension_numbers = #tpu.dot_dimension_numbers<[1], [0], [0], [1], [0, 0, 1, 1], [], []>} : vector<32x8xf32>, vector<8x16xf32>, vector<32x16xf32> -> vector<32x16xf32>
      %11 = vector.shape_cast %10 : vector<32x16xf32> to vector<4x8x16xf32>
      %12 = vector.shape_cast %7 : vector<16x8xf32> to vector<1x16x8xf32>
      %13 = vector.broadcast %12 : vector<1x16x8xf32> to vector<4x16x8xf32>
      %cst_8 = arith.constant dense<0.000000e+00> : vector<4x16x16xf32>
      %14 = tpu.matmul %13, %11, %cst_8 {dimension_numbers = #tpu.dot_dimension_numbers<[2], [1], [1], [2], [0, 0, 0, 1, 1, 2], [0], [0]>} : vector<4x16x8xf32>, vector<4x8x16xf32>, vector<4x16x16xf32> -> vector<4x16x16xf32>
      %c0_9 = arith.constant 0 : index
      %c0_10 = arith.constant 0 : index
      %c0_11 = arith.constant 0 : index
      %15 = vector.load %arg6[%c0_9, %c0_10, %c0_11] : memref<4x16x16xf32, #tpu.memory_space<vmem>>, vector<4x16x16xf32>
      tpu.vector_store %arg6[%c0_9, %c0_10, %c0_11], %14 {strides = array<i32>} : memref<4x16x16xf32, #tpu.memory_space<vmem>>, vector<4x16x16xf32>,
    } else {
    }
    %c1_i32_0 = arith.constant 1 : i32
    %3 = arith.cmpi sge, %arg1, %c1_i32_0 : i32
    %4 = arith.extui %3 : i1 to i32
    %c0_i32_1 = arith.constant 0 : i32
    %5 = arith.cmpi ne, %4, %c0_i32_1 : i32
    scf.if %5 {
      %c0 = arith.constant 0 : index
      %c0_2 = arith.constant 0 : index
      %c0_3 = arith.constant 0 : index
      %6 = vector.load %arg3[%c0, %c0_2, %c0_3] : memref<4x16x16xf32, #tpu.memory_space<vmem>>, vector<4x16x16xf32>
      %c0_4 = arith.constant 0 : index
      %c0_5 = arith.constant 0 : index
      %c0_6 = arith.constant 0 : index
      %7 = vector.load %arg6[%c0_4, %c0_5, %c0_6] : memref<4x16x16xf32, #tpu.memory_space<vmem>>, vector<4x16x16xf32>
      tpu.vector_store %arg6[%c0_4, %c0_5, %c0_6], %6 {strides = array<i32>} : memref<4x16x16xf32, #tpu.memory_space<vmem>>, vector<4x16x16xf32>,
    } else {
    }
    return
  }
  func.func @transform_0(%arg0: i32, %arg1: i32) -> (i32, i32, i32) {
    %c1_i32 = arith.constant 1 : i32
    %0 = arith.muli %arg0, %c1_i32 : i32
    %c0_i32 = arith.constant 0 : i32
    %1 = arith.minsi %arg1, %c0_i32 : i32
    %2 = arith.addi %0, %1 : i32
    %c0_i32_0 = arith.constant 0 : i32
    %c0_i32_1 = arith.constant 0 : i32
    %c0_i32_2 = arith.constant 0 : i32
    return %2, %c0_i32_0, %c0_i32_1 : i32, i32, i32
  }
  func.func @transform_1(%arg0: i32, %arg1: i32) -> (i32, i32, i32) {
    %c1_i32 = arith.constant 1 : i32
    %0 = arith.muli %arg0, %c1_i32 : i32
    %c1_i32_0 = arith.constant 1 : i32
    %1 = arith.subi %arg1, %c1_i32_0 : i32
    %c0_i32 = arith.constant 0 : i32
    %2 = arith.maxsi %1, %c0_i32 : i32
    %3 = arith.addi %0, %2 : i32
    %c0_i32_1 = arith.constant 0 : i32
    %c0_i32_2 = arith.constant 0 : i32
    %c0_i32_3 = arith.constant 0 : i32
    return %3, %c0_i32_1, %c0_i32_2 : i32, i32, i32
  }
  func.func @transform_2(%arg0: i32, %arg1: i32) -> (i32, i32) {
    %c0_i32 = arith.constant 0 : i32
    %c0_i32_0 = arith.constant 0 : i32
    %c0_i32_1 = arith.constant 0 : i32
    return %c0_i32, %c0_i32_0 : i32, i32
  }
  func.func @transform_3(%arg0: i32, %arg1: i32) -> (i32, i32) {
    %c0_i32 = arith.constant 0 : i32
    %c0_i32_0 = arith.constant 0 : i32
    %c0_i32_1 = arith.constant 0 : i32
    return %c0_i32, %c0_i32_0 : i32, i32
  }
  func.func @transform_4(%arg0: i32, %arg1: i32) -> (i32, i32, i32) {
    %c2_i32 = arith.constant 2 : i32
    %0 = arith.muli %arg0, %c2_i32 : i32
    %1 = arith.addi %0, %arg1 : i32
    %c0_i32 = arith.constant 0 : i32
    %c0_i32_0 = arith.constant 0 : i32
    %c0_i32_1 = arith.constant 0 : i32
    return %1, %c0_i32, %c0_i32_0 : i32, i32, i32
  }
}

</mosaic_0001>

<llo_original>
// kernel: tpu_custom_call.1
$region0: #{tpu_custom_call.1}
  #allocation0 [shape = 'u32[]', space=smem, size = 0x4, offset = 0x4, fixed_abs, tag = 'smem constant byte address 0x4 - core index']
  #allocation1 [shape = 'u32[144,128]{1,0:T(1,128)}', space=vmem, size = 0x12000, scoped, tag = 'internal scratch']
  %s0 = inlined_call_operand.hbm [shape: f32[8,8,8], index: 0, kind: input, shape index: {}]
  %s1 = inlined_call_operand.hbm [shape: f32[8,16,16], index: 1, kind: input, shape index: {}]
  %s2 = inlined_call_operand.vmem [shape: f32[16,8], index: 2, kind: input, shape index: {}]
  %s3 = inlined_call_operand.vmem [shape: f32[8,16], index: 3, kind: input, shape index: {}]
  %s4 = inlined_call_operand.hbm [shape: f32[16,16,16], index: 4, kind: output, shape index: {}]
  %s5 = sld [smem:[#allocation0]]
  $region65: #{tpu_custom_call.1} parent=0
    _
  %s7 = ssub.s32 1, %s5
  %s8 = scalar_select 0, %s7, %s5
  $region1: #{tpu_custom_call.1} parent=0
    #allocation2 [shape = 'u8[32768]{0}', space=vmem, size = 0x8000, scoped, tag = 'input window, operand 0']
    #allocation3 [shape = 's32[2]{0}', space=sflag, size = 0x8, scoped, tag = 'scoped memory for tpu_custom_call.1']
    #allocation4 [shape = 's32[2]{0}', space=sflag, size = 0x8, scoped, tag = 'scoped memory for tpu_custom_call.1']
    #allocation5 [shape = 'u8[65536]{0}', space=vmem, size = 0x10000, scoped, tag = 'input window, operand 1']
    #allocation6 [shape = 's32[2]{0}', space=sflag, size = 0x8, scoped, tag = 'scoped memory for tpu_custom_call.1']
    #allocation7 [shape = 'u8[65536]{0}', space=vmem, size = 0x10000, scoped, tag = 'output window, operand 0']
    %9 = vsyncpa [#allocation3], 0
    %s10 = scalar_lea.sflag [#allocation3], 1
    %11 = vsyncpa %s10, 0
    %12 = vsyncpa [#allocation6], 0
    %s13 = scalar_lea.sflag [#allocation6], 1
    %14 = vsyncpa %s13, 0
    %15 = vsyncpa [#allocation4], 0
    %s16 = scalar_lea.sflag [#allocation4], 1
    %17 = vsyncpa %s16, 0
    loop: start=0, step=1, limit=6
    $region2: #{tpu_custom_call.1} parent=1 // loop_pre_header
      _
    $region3: #{tpu_custom_call.1} parent=1 // loop_header
      %s19 = sphi 0, %s23
      %p20 = scmp.ge.s32.totalorder %s19, 6
      %s26 = sphi 0, %s38
      %s27 = sphi 0, %s34
      %s28 = sphi 0, %s26
      %s29 = sphi 0, %s27
      %s30 = sphi 0, %s28
      %s31 = sphi 0, %s29
      %s47 = sphi 0, %s49
      %s50 = sphi 0, %s47
      %s51 = sphi 0, %s50
      %s67 = sphi 0, %s51
      %s81 = sphi 0, %s83
      %s84 = sphi 0, %s81
      %s85 = sphi 0, %s84
      %s101 = sphi 0, %s85
      %s105 = sphi 0, %s105
      %s107 = sphi 0, %s105
      %s108 = sphi 0, %s107
      %s122 = sphi 0, %s108
      %s126 = sphi 0, %s126
      %s128 = sphi 0, %s126
      %s129 = sphi 0, %s128
      %s143 = sphi 0, %s129
      %s153 = sphi 0, %s155
      %s156 = sphi 0, %s153
      %s157 = sphi 0, %s156
      %s173 = sphi 0, %s157
    $region4: #{tpu_custom_call.1} parent=1 // loop_header_branch
      %22 = sbr.rel (%p20) target = $region8
    $region5: #{tpu_custom_call.1} parent=1 // loop_body
      %s24 = ssub.s32 %s19, 1
      %s25 = ssub.s32 %s19, 2
      %s32 = sadd.s32 1, %s27
      %p33 = scmp.ge.s32.totalorder %s32, 2
      %s34 = scalar_select %p33, 0, %s32
      %s35 = sadd.s32 1, %s26
      %s36 = scalar_select %p33, %s35, %s26
      %p37 = scmp.ge.s32.totalorder %s36, 2
      %s38 = scalar_select %p37, 0, %s36
      %p39 = scmp.lt.s32.totalorder %s27, 0
      %s40 = scalar_select %p39, %s27, 0
      %s41 = sadd.s32 %s26, %s40
      %p42 = scmp.lt.s32.totalorder %s34, 0
      %s43 = scalar_select %p42, %s34, 0
      %s44 = sadd.s32 %s38, %s43
      %s45 = ssub.s32 %s41, %s44
      %p46 = scmp.eq.s32.totalorder %s45, 0
      %s48 = sadd.s32 %s47, 1
      %s49 = scalar_select %p46, %s47, %s48
      %p52 = pneg %p46
      %p53 = scmp.eq.s32.totalorder %s19, 3
      %p54 = por %p52, %p53
      %p55 = scmp.ne.s32.totalorder %s47, %s50
      %p56 = scmp.eq.s32.totalorder %s19, 0
      %p57 = por %p55, %p56
      %p58 = scmp.ne.s32.totalorder %s47, %s50
      %p59 = scmp.eq.s32.totalorder %s24, 3
      %p60 = por %p58, %p59
      %p61 = scmp.ne.s32.totalorder %s50, %s51
      %p62 = scmp.eq.s32.totalorder %s24, 0
      %p63 = por %p61, %p62
      %p64 = scmp.ne.s32.totalorder %s50, %s51
      %p65 = scmp.eq.s32.totalorder %s25, 3
      %p66 = por %p64, %p65
      %p68 = scmp.ne.s32.totalorder %s51, %s67
      %p69 = scmp.eq.s32.totalorder %s25, 0
      %p70 = por %p68, %p69
      %s71 = ssub.s32 %s27, 1
      %p72 = scmp.gt.s32.totalorder %s71, 0
      %s73 = scalar_select %p72, %s71, 0
      %s74 = sadd.s32 %s26, %s73
      %s75 = ssub.s32 %s34, 1
      %p76 = scmp.gt.s32.totalorder %s75, 0
      %s77 = scalar_select %p76, %s75, 0
      %s78 = sadd.s32 %s38, %s77
      %s79 = ssub.s32 %s74, %s78
      %p80 = scmp.eq.s32.totalorder %s79, 0
      %s82 = sadd.s32 %s81, 1
      %s83 = scalar_select %p80, %s81, %s82
      %p86 = pneg %p80
      %p87 = scmp.eq.s32.totalorder %s19, 3
      %p88 = por %p86, %p87
      %p89 = scmp.ne.s32.totalorder %s81, %s84
      %p90 = scmp.eq.s32.totalorder %s19, 0
      %p91 = por %p89, %p90
      %p92 = scmp.ne.s32.totalorder %s81, %s84
      %p93 = scmp.eq.s32.totalorder %s24, 3
      %p94 = por %p92, %p93
      %p95 = scmp.ne.s32.totalorder %s84, %s85
      %p96 = scmp.eq.s32.totalorder %s24, 0
      %p97 = por %p95, %p96
      %p98 = scmp.ne.s32.totalorder %s84, %s85
      %p99 = scmp.eq.s32.totalorder %s25, 3
      %p100 = por %p98, %p99
      %p102 = scmp.ne.s32.totalorder %s85, %s101
      %p103 = scmp.eq.s32.totalorder %s25, 0
      %p104 = por %p102, %p103
      %s106 = sadd.s32 %s105, 1
      %p109 = scmp.eq.s32.totalorder %s19, 3
      %p110 = scmp.ne.s32.totalorder %s105, %s107
      %p111 = scmp.eq.s32.totalorder %s19, 0
      %p112 = por %p110, %p111
      %p113 = scmp.ne.s32.totalorder %s105, %s107
      %p114 = scmp.eq.s32.totalorder %s24, 3
      %p115 = por %p113, %p114
      %p116 = scmp.ne.s32.totalorder %s107, %s108
      %p117 = scmp.eq.s32.totalorder %s24, 0
      %p118 = por %p116, %p117
      %p119 = scmp.ne.s32.totalorder %s107, %s108
      %p120 = scmp.eq.s32.totalorder %s25, 3
      %p121 = por %p119, %p120
      %p123 = scmp.ne.s32.totalorder %s108, %s122
      %p124 = scmp.eq.s32.totalorder %s25, 0
      %p125 = por %p123, %p124
      %s127 = sadd.s32 %s126, 1
      %p130 = scmp.eq.s32.totalorder %s19, 3
      %p131 = scmp.ne.s32.totalorder %s126, %s128
      %p132 = scmp.eq.s32.totalorder %s19, 0
      %p133 = por %p131, %p132
      %p134 = scmp.ne.s32.totalorder %s126, %s128
      %p135 = scmp.eq.s32.totalorder %s24, 3
      %p136 = por %p134, %p135
      %p137 = scmp.ne.s32.totalorder %s128, %s129
      %p138 = scmp.eq.s32.totalorder %s24, 0
      %p139 = por %p137, %p138
      %p140 = scmp.ne.s32.totalorder %s128, %s129
      %p141 = scmp.eq.s32.totalorder %s25, 3
      %p142 = por %p140, %p141
      %p144 = scmp.ne.s32.totalorder %s129, %s143
      %p145 = scmp.eq.s32.totalorder %s25, 0
      %p146 = por %p144, %p145
      %s147 = smul.u32 %s26, 2
      %s148 = sadd.s32 %s147, %s27
      %s149 = smul.u32 %s38, 2
      %s150 = sadd.s32 %s149, %s34
      %s151 = ssub.s32 %s148, %s150
      %p152 = scmp.eq.s32.totalorder %s151, 0
      %s154 = sadd.s32 %s153, 1
      %s155 = scalar_select %p152, %s153, %s154
      %p158 = pneg %p152
      %p159 = scmp.eq.s32.totalorder %s19, 3
      %p160 = por %p158, %p159
      %p161 = scmp.ne.s32.totalorder %s153, %s156
      %p162 = scmp.eq.s32.totalorder %s19, 0
      %p163 = por %p161, %p162
      %p164 = scmp.ne.s32.totalorder %s153, %s156
      %p165 = scmp.eq.s32.totalorder %s24, 3
      %p166 = por %p164, %p165
      %p167 = scmp.ne.s32.totalorder %s156, %s157
      %p168 = scmp.eq.s32.totalorder %s24, 0
      %p169 = por %p167, %p168
      %p170 = scmp.ne.s32.totalorder %s156, %s157
      %p171 = scmp.eq.s32.totalorder %s25, 3
      %p172 = por %p170, %p171
      %p174 = scmp.ne.s32.totalorder %s157, %s173
      %p175 = scmp.eq.s32.totalorder %s25, 0
      %p176 = por %p174, %p175
      %p177 = scmp.le.s32.totalorder 1, %s19
      %p178 = scmp.lt.s32.totalorder %s19, 5
      %p179 = pnand %p177, %p178
      %p180 = pneg %p179
      // Predicated region
      $region9: #{tpu_custom_call.1} parent=5 // pred_check
        _
      $region10: #{tpu_custom_call.1} parent=5 // pred_check_branch
        %182 = sbr.rel (%p179) target = $region12
      $region11: #{tpu_custom_call.1} parent=5 // pred_region
        %s183 = ssub.s32 %s19, 1
        // Predicated region
        $region13: #{tpu_custom_call.1} parent=11 // pred_check
          %p184 = pneg %p118
        $region14: #{tpu_custom_call.1} parent=11 // pred_check_branch
          %186 = sbr.rel (%p184) target = $region16
        $region15: #{tpu_custom_call.1} parent=11 // pred_region
          _
        $region16: #{tpu_custom_call.1} parent=11 // pred_fallthru
          _
        // Predicated region
        $region17: #{tpu_custom_call.1} parent=11 // pred_check
          %p187 = pneg %p139
        $region18: #{tpu_custom_call.1} parent=11 // pred_check_branch
          %189 = sbr.rel (%p187) target = $region20
        $region19: #{tpu_custom_call.1} parent=11 // pred_region
          _
        $region20: #{tpu_custom_call.1} parent=11 // pred_fallthru
          _
      $region12: #{tpu_custom_call.1} parent=5 // pred_fallthru
        _
      %p190 = scmp.lt.s32.totalorder %s19, 4
      // Predicated region
      $region21: #{tpu_custom_call.1} parent=5 // pred_check
        %p191 = pneg %p190
      $region22: #{tpu_custom_call.1} parent=5 // pred_check_branch
        %193 = sbr.rel (%p191) target = $region24
      $region23: #{tpu_custom_call.1} parent=5 // pred_region
        // Predicated region
        $region25: #{tpu_custom_call.1} parent=23 // pred_check
          %p194 = pneg %p57
        $region26: #{tpu_custom_call.1} parent=23 // pred_check_branch
          %196 = sbr.rel (%p194) target = $region28
        $region27: #{tpu_custom_call.1} parent=23 // pred_region
          %s197 = sand.u32 %s47, 1
          %s198 = scalar_lea.sflag [#allocation3], %s197
          %s199 = sand.u32 %s47, 1
          %s200 = smul.addr %s199, 32
          %s201 = scalar_lea.vmem [#allocation2], %s200
          %p202 = scmp.lt.s32.totalorder %s27, 0
          %s203 = scalar_select %p202, %s27, 0
          %s204 = sadd.s32 %s26, %s203
          %s205 = smul.u32 4, %s204
          %s207 = ssub.s32 512, 512
          %208 = vsyncadd %s198, %s207
          %s209 = smul.addr %s205, 128
          %s210 = scalar_lea.hbm %s0, %s209
          %s211 = sshll.u32 %s201, 4
          %s212 = int_to_ptr.vmem [resolvable:$true] %s211
          %217 = dma.hbm_to_vmem [thread:$0]  %s210, 512, %s212, %s198, 128, 128, 8
        $region28: #{tpu_custom_call.1} parent=23 // pred_fallthru
          _
        // Predicated region
        $region29: #{tpu_custom_call.1} parent=23 // pred_check
          %p218 = pneg %p91
        $region30: #{tpu_custom_call.1} parent=23 // pred_check_branch
          %220 = sbr.rel (%p218) target = $region32
        $region31: #{tpu_custom_call.1} parent=23 // pred_region
          %s221 = sand.u32 %s81, 1
          %s222 = scalar_lea.sflag [#allocation6], %s221
          %s223 = sand.u32 %s81, 1
          %s224 = smul.addr %s223, 64
          %s225 = scalar_lea.vmem [#allocation5], %s224
          %s226 = ssub.s32 %s27, 1
          %p227 = scmp.gt.s32.totalorder %s226, 0
          %s228 = scalar_select %p227, %s226, 0
          %s229 = sadd.s32 %s26, %s228
          %s230 = smul.u32 4, %s229
          %s232 = ssub.s32 1024, 1024
          %233 = vsyncadd %s222, %s232
          %s234 = smul.addr %s230, 2
          %s235 = smul.addr %s234, 128
          %s236 = scalar_lea.hbm %s1, %s235
          %s237 = sshll.u32 %s225, 4
          %s238 = int_to_ptr.vmem [resolvable:$true] %s237
          %243 = dma.hbm_to_vmem [thread:$0]  %s236, 1024, %s238, %s222, 128, 128, 8
        $region32: #{tpu_custom_call.1} parent=23 // pred_fallthru
          _
      $region24: #{tpu_custom_call.1} parent=5 // pred_fallthru
        _
      %p244 = scmp.le.s32.totalorder 1, %s19
      %p245 = scmp.lt.s32.totalorder %s19, 5
      %p246 = pnand %p244, %p245
      %p247 = pneg %p246
      // Predicated region
      $region33: #{tpu_custom_call.1} parent=5 // pred_check
        _
      $region34: #{tpu_custom_call.1} parent=5 // pred_check_branch
        %249 = sbr.rel (%p246) target = $region36
      $region35: #{tpu_custom_call.1} parent=5 // pred_region
        %s250 = ssub.s32 %s19, 1
        %s251 = sand.u32 %s50, 1
        %s252 = scalar_lea.sflag [#allocation3], %s251
        %s253 = sand.u32 %s50, 1
        %s254 = smul.addr %s253, 32
        %s255 = scalar_lea.vmem [#allocation2], %s254
        // Predicated region
        $region37: #{tpu_custom_call.1} parent=35 // pred_check
          %p256 = pneg %p63
        $region38: #{tpu_custom_call.1} parent=35 // pred_check_branch
          %258 = sbr.rel (%p256) target = $region40
        $region39: #{tpu_custom_call.1} parent=35 // pred_region
          %259 = dma.done %s252, 512
        $region40: #{tpu_custom_call.1} parent=35 // pred_fallthru
          _
        %s260 = sand.u32 %s84, 1
        %s261 = scalar_lea.sflag [#allocation6], %s260
        %s262 = sand.u32 %s84, 1
        %s263 = smul.addr %s262, 64
        %s264 = scalar_lea.vmem [#allocation5], %s263
        // Predicated region
        $region41: #{tpu_custom_call.1} parent=35 // pred_check
          %p265 = pneg %p97
        $region42: #{tpu_custom_call.1} parent=35 // pred_check_branch
          %267 = sbr.rel (%p265) target = $region44
        $region43: #{tpu_custom_call.1} parent=35 // pred_region
          %268 = dma.done %s261, 1024
        $region44: #{tpu_custom_call.1} parent=35 // pred_fallthru
          _
        %s269 = sand.u32 %s50, 1
        %s270 = scalar_lea.sflag [#allocation3], %s269
        %s271 = sand.u32 %s50, 1
        %s272 = smul.addr %s271, 32
        %s273 = scalar_lea.vmem [#allocation2], %s272
        %p274 = pneg %p63
        %p275 = pneg %p60
        %s276 = sand.u32 %s84, 1
        %s277 = scalar_lea.sflag [#allocation6], %s276
        %s278 = sand.u32 %s84, 1
        %s279 = smul.addr %s278, 64
        %s280 = scalar_lea.vmem [#allocation5], %s279
        %p281 = pneg %p97
        %p282 = pneg %p94
        %p283 = pneg %p118
        %p284 = pneg %p115
        %p285 = pneg %p139
        %p286 = pneg %p136
        %p287 = pneg %p169
        %p288 = pneg %p166
        %s289 = sand.u32 %s156, 1
        %s290 = scalar_lea.sflag [#allocation4], %s289
        %s291 = sand.u32 %s156, 1
        %s292 = smul.addr %s291, 64
        %s293 = scalar_lea.vmem [#allocation7], %s292
        %p294 = scmp.lt.s32.totalorder %s29, 0
        %s295 = scalar_select %p294, %s29, 0
        %s296 = sadd.s32 %s28, %s295
        %s297 = smul.u32 4, %s296
        %s298 = ssub.s32 %s29, 1
        %p299 = scmp.gt.s32.totalorder %s298, 0
        %s300 = scalar_select %p299, %s298, 0
        %s301 = sadd.s32 %s28, %s300
        %s302 = smul.u32 4, %s301
        %s303 = smul.u32 %s28, 2
        %s304 = sadd.s32 %s303, %s29
        %s305 = smul.u32 4, %s304
        %p306 = scmp.lt.s32.totalorder %s29, 1
        // Predicated region
        $region45: #{tpu_custom_call.1} parent=35 // pred_check
          %p307 = pneg %p306
        $region46: #{tpu_custom_call.1} parent=35 // pred_check_branch
          %309 = sbr.rel (%p307) target = $region48
        $region47: #{tpu_custom_call.1} parent=35 // pred_region
          %v310 = vld [vmem:[%s255] sm:$0xff]
          %v311 = vld [vmem:[%s255 + $0x8] sm:$0xff]
          %v312 = vld [vmem:[%s255 + $0x10] sm:$0xff]
          %v313 = vld [vmem:[%s255 + $0x18] sm:$0xff]
          %v314 = vld [vmem:[%s2] sm:$0xff]
          %v315 = vld [vmem:[%s2 + $0x8] sm:$0xff]
          %v316 = vld [vmem:[%s3] sm:$0xff]
          %vm317 = vcmask 64512
          %v319 = vsel %vm317, %v310, 0
          %v322 = vsel %vm317, %v311, 0
          %v325 = vsel %vm317, %v312, 0
          %v328 = vsel %vm317, %v313, 0
          %330 = vmatprep.subr.mxu0 0.0
          %331 = vmatpush1.msra.mxu0 %v316
          %332 = vmatprep.subr.mxu0 0.0
          %333 = vmatpush1.msra.mxu0 0.0
          %334 = vmatprep.subr.mxu0 0.0
          %335 = vmatpush1.msra.mxu0 0.0
          %336 = vmatprep.subr.mxu0 0.0
          %337 = vmatpush1.msra.mxu0 0.0
          %338 = vmatprep.subr.mxu0 0.0
          %339 = vmatpush1.msra.mxu0 0.0
          %340 = vmatprep.subr.mxu0 0.0
          %341 = vmatpush1.msra.mxu0 0.0
          %342 = vmatprep.subr.mxu0 0.0
          %343 = vmatpush1.msra.mxu0 0.0
          %344 = vmatprep.subr.mxu0 0.0
          %345 = vmatpush1.msra.mxu0 0.0
          %346 = vmatprep.subr.mxu0 0.0
          %347 = vmatpush1.msra.mxu0 0.0
          %348 = vmatprep.subr.mxu0 0.0
          %349 = vmatpush1.msra.mxu0 0.0
          %350 = vmatprep.subr.mxu0 0.0
          %351 = vmatpush1.msra.mxu0 0.0
          %352 = vmatprep.subr.mxu0 0.0
          %353 = vmatpush1.msra.mxu0 0.0
          %354 = vmatprep.subr.mxu0 0.0
          %355 = vmatpush1.msra.mxu0 0.0
          %356 = vmatprep.subr.mxu0 0.0
          %357 = vmatpush1.msra.mxu0 0.0
          %358 = vmatprep.subr.mxu0 0.0
          %359 = vmatpush1.msra.mxu0 0.0
          %360 = vmatprep.subr.mxu0 0.0
          %361 = vmatpush1.msra.mxu0 0.0
          %362 = vmatprep.subr.mxu0 0.0
          %363 = vmatpush1.msra.mxu0 0.0
          %364 = vmatprep.subr.mxu0 0.0
          %365 = vmatpush1.msra.mxu0 0.0
          %366 = vmatprep.subr.mxu0 0.0
          %367 = vmatpush1.msra.mxu0 0.0
          %368 = vmatprep.subr.mxu0 0.0
          %369 = vmatpush1.msra.mxu0 0.0
          %370 = vmatprep.subr.mxu0 0.0
          %371 = vmatpush1.msra.mxu0 0.0
          %372 = vmatprep.subr.mxu0 0.0
          %373 = vmatpush1.msra.mxu0 0.0
          %374 = vmatprep.subr.mxu0 0.0
          %375 = vmatpush1.msra.mxu0 0.0
          %376 = vmatprep.subr.mxu0 0.0
          %377 = vmatpush1.msra.mxu0 0.0
          %378 = vmatprep.subr.mxu0 0.0
          %379 = vmatpush1.msra.mxu0 0.0
          %380 = vmatprep.subr.mxu0 0.0
          %381 = vmatpush1.msra.mxu0 0.0
          %382 = vmatprep.subr.mxu0 0.0
          %383 = vmatpush1.msra.mxu0 0.0
          %384 = vmatprep.subr.mxu0 0.0
          %385 = vmatpush1.msra.mxu0 0.0
          %386 = vmatprep.subr.mxu0 0.0
          %387 = vmatpush1.msra.mxu0 0.0
          %388 = vmatprep.subr.mxu0 0.0
          %389 = vmatpush1.msra.mxu0 0.0
          %390 = vmatprep.subr.mxu0 0.0
          %391 = vmatpush1.msra.mxu0 0.0
          %392 = vmatprep.subr.mxu0 0.0
          %393 = vmatpush1.msra.mxu0 0.0
          %394 = vmatprep.mubr.f32.mxu0 0.0
          %395 = vmatmul.mubr.f32.gmra.mrb[0].mxu0 %v319
          %v396 = vpop.f32.mrb[0].mxu0
          %v397 = vadd.f32 0.0, %v396
          %v398 = vpop.f32.mrb[0].mxu0
          %399 = vmatprep.mubr.f32.mxu0 0.0
          %400 = vmatmul.mubr.f32.gmra.mrb[0].mxu0 %v322
          %v401 = vpop.f32.mrb[0].mxu0
          %v402 = vadd.f32 0.0, %v401
          %v403 = vpop.f32.mrb[0].mxu0
          %404 = vmatprep.mubr.f32.mxu0 0.0
          %405 = vmatmul.mubr.f32.gmra.mrb[0].mxu0 %v325
          %v406 = vpop.f32.mrb[0].mxu0
          %v407 = vadd.f32 0.0, %v406
          %v408 = vpop.f32.mrb[0].mxu0
          %409 = vmatprep.mubr.f32.mxu0 0.0
          %410 = vmatmul.mubr.f32.gmra.mrb[0].mxu0 %v328
          %v411 = vpop.f32.mrb[0].mxu0
          %v412 = vadd.f32 0.0, %v411
          %v413 = vpop.f32.mrb[0].mxu0
          %414 = vdwg.mxu0
          %v416 = vsel %vm317, %v314, 0
          %v419 = vsel %vm317, %v315, 0
          %421 = vmatprep.subr.mxu0 0.0
          %422 = vmatpush1.msra.mxu0 %v397
          %423 = vmatprep.subr.mxu0 0.0
          %424 = vmatpush1.msra.mxu0 0.0
          %425 = vmatprep.subr.mxu0 0.0
          %426 = vmatpush1.msra.mxu0 0.0
          %427 = vmatprep.subr.mxu0 0.0
          %428 = vmatpush1.msra.mxu0 0.0
          %429 = vmatprep.subr.mxu0 0.0
          %430 = vmatpush1.msra.mxu0 0.0
          %431 = vmatprep.subr.mxu0 0.0
          %432 = vmatpush1.msra.mxu0 0.0
          %433 = vmatprep.subr.mxu0 0.0
          %434 = vmatpush1.msra.mxu0 0.0
          %435 = vmatprep.subr.mxu0 0.0
          %436 = vmatpush1.msra.mxu0 0.0
          %437 = vmatprep.subr.mxu0 0.0
          %438 = vmatpush1.msra.mxu0 0.0
          %439 = vmatprep.subr.mxu0 0.0
          %440 = vmatpush1.msra.mxu0 0.0
          %441 = vmatprep.subr.mxu0 0.0
          %442 = vmatpush1.msra.mxu0 0.0
          %443 = vmatprep.subr.mxu0 0.0
          %444 = vmatpush1.msra.mxu0 0.0
          %445 = vmatprep.subr.mxu0 0.0
          %446 = vmatpush1.msra.mxu0 0.0
          %447 = vmatprep.subr.mxu0 0.0
          %448 = vmatpush1.msra.mxu0 0.0
          %449 = vmatprep.subr.mxu0 0.0
          %450 = vmatpush1.msra.mxu0 0.0
          %451 = vmatprep.subr.mxu0 0.0
          %452 = vmatpush1.msra.mxu0 0.0
          %453 = vmatprep.subr.mxu0 0.0
          %454 = vmatpush1.msra.mxu0 0.0
          %455 = vmatprep.subr.mxu0 0.0
          %456 = vmatpush1.msra.mxu0 0.0
          %457 = vmatprep.subr.mxu0 0.0
          %458 = vmatpush1.msra.mxu0 0.0
          %459 = vmatprep.subr.mxu0 0.0
          %460 = vmatpush1.msra.mxu0 0.0
          %461 = vmatprep.subr.mxu0 0.0
          %462 = vmatpush1.msra.mxu0 0.0
          %463 = vmatprep.subr.mxu0 0.0
          %464 = vmatpush1.msra.mxu0 0.0
          %465 = vmatprep.subr.mxu0 0.0
          %466 = vmatpush1.msra.mxu0 0.0
          %467 = vmatprep.subr.mxu0 0.0
          %468 = vmatpush1.msra.mxu0 0.0
          %469 = vmatprep.subr.mxu0 0.0
          %470 = vmatpush1.msra.mxu0 0.0
          %471 = vmatprep.subr.mxu0 0.0
          %472 = vmatpush1.msra.mxu0 0.0
          %473 = vmatprep.subr.mxu0 0.0
          %474 = vmatpush1.msra.mxu0 0.0
          %475 = vmatprep.subr.mxu0 0.0
          %476 = vmatpush1.msra.mxu0 0.0
          %477 = vmatprep.subr.mxu0 0.0
          %478 = vmatpush1.msra.mxu0 0.0
          %479 = vmatprep.subr.mxu0 0.0
          %480 = vmatpush1.msra.mxu0 0.0
          %481 = vmatprep.subr.mxu0 0.0
          %482 = vmatpush1.msra.mxu0 0.0
          %483 = vmatprep.subr.mxu0 0.0
          %484 = vmatpush1.msra.mxu0 0.0
          %485 = vmatprep.mubr.f32.mxu0 0.0
          %486 = vmatmul.mubr.f32.gmra.mrb[0].mxu0 %v416
          %v487 = vpop.f32.mrb[0].mxu0
          %v488 = vadd.f32 0.0, %v487
          %v489 = vpop.f32.mrb[0].mxu0
          %490 = vmatprep.mubr.f32.mxu0 0.0
          %491 = vmatmul.mubr.f32.gmra.mrb[0].mxu0 %v419
          %v492 = vpop.f32.mrb[0].mxu0
          %v493 = vadd.f32 0.0, %v492
          %v494 = vpop.f32.mrb[0].mxu0
          %495 = vdwg.mxu0
          %496 = vmatprep.subr.mxu0 0.0
          %497 = vmatpush1.msra.mxu0 %v402
          %498 = vmatprep.subr.mxu0 0.0
          %499 = vmatpush1.msra.mxu0 0.0
          %500 = vmatprep.subr.mxu0 0.0
          %501 = vmatpush1.msra.mxu0 0.0
          %502 = vmatprep.subr.mxu0 0.0
          %503 = vmatpush1.msra.mxu0 0.0
          %504 = vmatprep.subr.mxu0 0.0
          %505 = vmatpush1.msra.mxu0 0.0
          %506 = vmatprep.subr.mxu0 0.0
          %507 = vmatpush1.msra.mxu0 0.0
          %508 = vmatprep.subr.mxu0 0.0
          %509 = vmatpush1.msra.mxu0 0.0
          %510 = vmatprep.subr.mxu0 0.0
          %511 = vmatpush1.msra.mxu0 0.0
          %512 = vmatprep.subr.mxu0 0.0
          %513 = vmatpush1.msra.mxu0 0.0
          %514 = vmatprep.subr.mxu0 0.0
          %515 = vmatpush1.msra.mxu0 0.0
          %516 = vmatprep.subr.mxu0 0.0
          %517 = vmatpush1.msra.mxu0 0.0
          %518 = vmatprep.subr.mxu0 0.0
          %519 = vmatpush1.msra.mxu0 0.0
          %520 = vmatprep.subr.mxu0 0.0
          %521 = vmatpush1.msra.mxu0 0.0
          %522 = vmatprep.subr.mxu0 0.0
          %523 = vmatpush1.msra.mxu0 0.0
          %524 = vmatprep.subr.mxu0 0.0
          %525 = vmatpush1.msra.mxu0 0.0
          %526 = vmatprep.subr.mxu0 0.0
          %527 = vmatpush1.msra.mxu0 0.0
          %528 = vmatprep.subr.mxu0 0.0
          %529 = vmatpush1.msra.mxu0 0.0
          %530 = vmatprep.subr.mxu0 0.0
          %531 = vmatpush1.msra.mxu0 0.0
          %532 = vmatprep.subr.mxu0 0.0
          %533 = vmatpush1.msra.mxu0 0.0
          %534 = vmatprep.subr.mxu0 0.0
          %535 = vmatpush1.msra.mxu0 0.0
          %536 = vmatprep.subr.mxu0 0.0
          %537 = vmatpush1.msra.mxu0 0.0
          %538 = vmatprep.subr.mxu0 0.0
          %539 = vmatpush1.msra.mxu0 0.0
          %540 = vmatprep.subr.mxu0 0.0
          %541 = vmatpush1.msra.mxu0 0.0
          %542 = vmatprep.subr.mxu0 0.0
          %543 = vmatpush1.msra.mxu0 0.0
          %544 = vmatprep.subr.mxu0 0.0
          %545 = vmatpush1.msra.mxu0 0.0
          %546 = vmatprep.subr.mxu0 0.0
          %547 = vmatpush1.msra.mxu0 0.0
          %548 = vmatprep.subr.mxu0 0.0
          %549 = vmatpush1.msra.mxu0 0.0
          %550 = vmatprep.subr.mxu0 0.0
          %551 = vmatpush1.msra.mxu0 0.0
          %552 = vmatprep.subr.mxu0 0.0
          %553 = vmatpush1.msra.mxu0 0.0
          %554 = vmatprep.subr.mxu0 0.0
          %555 = vmatpush1.msra.mxu0 0.0
          %556 = vmatprep.subr.mxu0 0.0
          %557 = vmatpush1.msra.mxu0 0.0
          %558 = vmatprep.subr.mxu0 0.0
          %559 = vmatpush1.msra.mxu0 0.0
          %560 = vmatprep.mubr.f32.mxu0 0.0
          %561 = vmatmul.mubr.f32.gmra.mrb[0].mxu0 %v416
          %v562 = vpop.f32.mrb[0].mxu0
          %v563 = vadd.f32 0.0, %v562
          %v564 = vpop.f32.mrb[0].mxu0
          %565 = vmatprep.mubr.f32.mxu0 0.0
          %566 = vmatmul.mubr.f32.gmra.mrb[0].mxu0 %v419
          %v567 = vpop.f32.mrb[0].mxu0
          %v568 = vadd.f32 0.0, %v567
          %v569 = vpop.f32.mrb[0].mxu0
          %570 = vdwg.mxu0
          %571 = vmatprep.subr.mxu0 0.0
          %572 = vmatpush1.msra.mxu0 %v407
          %573 = vmatprep.subr.mxu0 0.0
          %574 = vmatpush1.msra.mxu0 0.0
          %575 = vmatprep.subr.mxu0 0.0
          %576 = vmatpush1.msra.mxu0 0.0
          %577 = vmatprep.subr.mxu0 0.0
          %578 = vmatpush1.msra.mxu0 0.0
          %579 = vmatprep.subr.mxu0 0.0
          %580 = vmatpush1.msra.mxu0 0.0
          %581 = vmatprep.subr.mxu0 0.0
          %582 = vmatpush1.msra.mxu0 0.0
          %583 = vmatprep.subr.mxu0 0.0
          %584 = vmatpush1.msra.mxu0 0.0
          %585 = vmatprep.subr.mxu0 0.0
          %586 = vmatpush1.msra.mxu0 0.0
          %587 = vmatprep.subr.mxu0 0.0
          %588 = vmatpush1.msra.mxu0 0.0
          %589 = vmatprep.subr.mxu0 0.0
          %590 = vmatpush1.msra.mxu0 0.0
          %591 = vmatprep.subr.mxu0 0.0
          %592 = vmatpush1.msra.mxu0 0.0
          %593 = vmatprep.subr.mxu0 0.0
          %594 = vmatpush1.msra.mxu0 0.0
          %595 = vmatprep.subr.mxu0 0.0
          %596 = vmatpush1.msra.mxu0 0.0
          %597 = vmatprep.subr.mxu0 0.0
          %598 = vmatpush1.msra.mxu0 0.0
          %599 = vmatprep.subr.mxu0 0.0
          %600 = vmatpush1.msra.mxu0 0.0
          %601 = vmatprep.subr.mxu0 0.0
          %602 = vmatpush1.msra.mxu0 0.0
          %603 = vmatprep.subr.mxu0 0.0
          %604 = vmatpush1.msra.mxu0 0.0
          %605 = vmatprep.subr.mxu0 0.0
          %606 = vmatpush1.msra.mxu0 0.0
          %607 = vmatprep.subr.mxu0 0.0
          %608 = vmatpush1.msra.mxu0 0.0
          %609 = vmatprep.subr.mxu0 0.0
          %610 = vmatpush1.msra.mxu0 0.0
          %611 = vmatprep.subr.mxu0 0.0
          %612 = vmatpush1.msra.mxu0 0.0
          %613 = vmatprep.subr.mxu0 0.0
          %614 = vmatpush1.msra.mxu0 0.0
          %615 = vmatprep.subr.mxu0 0.0
          %616 = vmatpush1.msra.mxu0 0.0
          %617 = vmatprep.subr.mxu0 0.0
          %618 = vmatpush1.msra.mxu0 0.0
          %619 = vmatprep.subr.mxu0 0.0
          %620 = vmatpush1.msra.mxu0 0.0
          %621 = vmatprep.subr.mxu0 0.0
          %622 = vmatpush1.msra.mxu0 0.0
          %623 = vmatprep.subr.mxu0 0.0
          %624 = vmatpush1.msra.mxu0 0.0
          %625 = vmatprep.subr.mxu0 0.0
          %626 = vmatpush1.msra.mxu0 0.0
          %627 = vmatprep.subr.mxu0 0.0
          %628 = vmatpush1.msra.mxu0 0.0
          %629 = vmatprep.subr.mxu0 0.0
          %630 = vmatpush1.msra.mxu0 0.0
          %631 = vmatprep.subr.mxu0 0.0
          %632 = vmatpush1.msra.mxu0 0.0
          %633 = vmatprep.subr.mxu0 0.0
          %634 = vmatpush1.msra.mxu0 0.0
          %635 = vmatprep.mubr.f32.mxu0 0.0
          %636 = vmatmul.mubr.f32.gmra.mrb[0].mxu0 %v416
          %v637 = vpop.f32.mrb[0].mxu0
          %v638 = vadd.f32 0.0, %v637
          %v639 = vpop.f32.mrb[0].mxu0
          %640 = vmatprep.mubr.f32.mxu0 0.0
          %641 = vmatmul.mubr.f32.gmra.mrb[0].mxu0 %v419
          %v642 = vpop.f32.mrb[0].mxu0
          %v643 = vadd.f32 0.0, %v642
          %v644 = vpop.f32.mrb[0].mxu0
          %645 = vdwg.mxu0
          %646 = vmatprep.subr.mxu0 0.0
          %647 = vmatpush1.msra.mxu0 %v412
          %648 = vmatprep.subr.mxu0 0.0
          %649 = vmatpush1.msra.mxu0 0.0
          %650 = vmatprep.subr.mxu0 0.0
          %651 = vmatpush1.msra.mxu0 0.0
          %652 = vmatprep.subr.mxu0 0.0
          %653 = vmatpush1.msra.mxu0 0.0
          %654 = vmatprep.subr.mxu0 0.0
          %655 = vmatpush1.msra.mxu0 0.0
          %656 = vmatprep.subr.mxu0 0.0
          %657 = vmatpush1.msra.mxu0 0.0
          %658 = vmatprep.subr.mxu0 0.0
          %659 = vmatpush1.msra.mxu0 0.0
          %660 = vmatprep.subr.mxu0 0.0
          %661 = vmatpush1.msra.mxu0 0.0
          %662 = vmatprep.subr.mxu0 0.0
          %663 = vmatpush1.msra.mxu0 0.0
          %664 = vmatprep.subr.mxu0 0.0
          %665 = vmatpush1.msra.mxu0 0.0
          %666 = vmatprep.subr.mxu0 0.0
          %667 = vmatpush1.msra.mxu0 0.0
          %668 = vmatprep.subr.mxu0 0.0
          %669 = vmatpush1.msra.mxu0 0.0
          %670 = vmatprep.subr.mxu0 0.0
          %671 = vmatpush1.msra.mxu0 0.0
          %672 = vmatprep.subr.mxu0 0.0
          %673 = vmatpush1.msra.mxu0 0.0
          %674 = vmatprep.subr.mxu0 0.0
          %675 = vmatpush1.msra.mxu0 0.0
          %676 = vmatprep.subr.mxu0 0.0
          %677 = vmatpush1.msra.mxu0 0.0
          %678 = vmatprep.subr.mxu0 0.0
          %679 = vmatpush1.msra.mxu0 0.0
          %680 = vmatprep.subr.mxu0 0.0
          %681 = vmatpush1.msra.mxu0 0.0
          %682 = vmatprep.subr.mxu0 0.0
          %683 = vmatpush1.msra.mxu0 0.0
          %684 = vmatprep.subr.mxu0 0.0
          %685 = vmatpush1.msra.mxu0 0.0
          %686 = vmatprep.subr.mxu0 0.0
          %687 = vmatpush1.msra.mxu0 0.0
          %688 = vmatprep.subr.mxu0 0.0
          %689 = vmatpush1.msra.mxu0 0.0
          %690 = vmatprep.subr.mxu0 0.0
          %691 = vmatpush1.msra.mxu0 0.0
          %692 = vmatprep.subr.mxu0 0.0
          %693 = vmatpush1.msra.mxu0 0.0
          %694 = vmatprep.subr.mxu0 0.0
          %695 = vmatpush1.msra.mxu0 0.0
          %696 = vmatprep.subr.mxu0 0.0
          %697 = vmatpush1.msra.mxu0 0.0
          %698 = vmatprep.subr.mxu0 0.0
          %699 = vmatpush1.msra.mxu0 0.0
          %700 = vmatprep.subr.mxu0 0.0
          %701 = vmatpush1.msra.mxu0 0.0
          %702 = vmatprep.subr.mxu0 0.0
          %703 = vmatpush1.msra.mxu0 0.0
          %704 = vmatprep.subr.mxu0 0.0
          %705 = vmatpush1.msra.mxu0 0.0
          %706 = vmatprep.subr.mxu0 0.0
          %707 = vmatpush1.msra.mxu0 0.0
          %708 = vmatprep.subr.mxu0 0.0
          %709 = vmatpush1.msra.mxu0 0.0
          %710 = vmatprep.mubr.f32.mxu0 0.0
          %711 = vmatmul.mubr.f32.gmra.mrb[0].mxu0 %v416
          %v712 = vpop.f32.mrb[0].mxu0
          %v713 = vadd.f32 0.0, %v712
          %v714 = vpop.f32.mrb[0].mxu0
          %715 = vmatprep.mubr.f32.mxu0 0.0
          %716 = vmatmul.mubr.f32.gmra.mrb[0].mxu0 %v419
          %v717 = vpop.f32.mrb[0].mxu0
          %v718 = vadd.f32 0.0, %v717
          %v719 = vpop.f32.mrb[0].mxu0
          %720 = vdwg.mxu0
          %vm721 = vcmask 130048
          %722 = vst.msk [vmem:[%s293] sm:$0xff] %vm721, %v488
          %723 = vst.msk [vmem:[%s293 + $0x8] sm:$0xff] %vm721, %v493
          %724 = vst.msk [vmem:[%s293 + $0x10] sm:$0xff] %vm721, %v563
          %725 = vst.msk [vmem:[%s293 + $0x18] sm:$0xff] %vm721, %v568
          %726 = vst.msk [vmem:[%s293 + $0x20] sm:$0xff] %vm721, %v638
          %727 = vst.msk [vmem:[%s293 + $0x28] sm:$0xff] %vm721, %v643
          %728 = vst.msk [vmem:[%s293 + $0x30] sm:$0xff] %vm721, %v713
          %729 = vst.msk [vmem:[%s293 + $0x38] sm:$0xff] %vm721, %v718
        $region48: #{tpu_custom_call.1} parent=35 // pred_fallthru
          _
        %p730 = scmp.ge.s32.totalorder %s29, 1
        // Predicated region
        $region49: #{tpu_custom_call.1} parent=35 // pred_check
          %p731 = pneg %p730
        $region50: #{tpu_custom_call.1} parent=35 // pred_check_branch
          %733 = sbr.rel (%p731) target = $region52
        $region51: #{tpu_custom_call.1} parent=35 // pred_region
          %v734 = vld [vmem:[%s264] sm:$0xff]
          %v735 = vld [vmem:[%s264 + $0x8] sm:$0xff]
          %v736 = vld [vmem:[%s264 + $0x10] sm:$0xff]
          %v737 = vld [vmem:[%s264 + $0x18] sm:$0xff]
          %v738 = vld [vmem:[%s264 + $0x20] sm:$0xff]
          %v739 = vld [vmem:[%s264 + $0x28] sm:$0xff]
          %v740 = vld [vmem:[%s264 + $0x30] sm:$0xff]
          %v741 = vld [vmem:[%s264 + $0x38] sm:$0xff]
          %vm742 = vcmask 130048
          %743 = vst.msk [vmem:[%s293] sm:$0xff] %vm742, %v734
          %744 = vst.msk [vmem:[%s293 + $0x8] sm:$0xff] %vm742, %v735
          %745 = vst.msk [vmem:[%s293 + $0x10] sm:$0xff] %vm742, %v736
          %746 = vst.msk [vmem:[%s293 + $0x18] sm:$0xff] %vm742, %v737
          %747 = vst.msk [vmem:[%s293 + $0x20] sm:$0xff] %vm742, %v738
          %748 = vst.msk [vmem:[%s293 + $0x28] sm:$0xff] %vm742, %v739
          %749 = vst.msk [vmem:[%s293 + $0x30] sm:$0xff] %vm742, %v740
          %750 = vst.msk [vmem:[%s293 + $0x38] sm:$0xff] %vm742, %v741
        $region52: #{tpu_custom_call.1} parent=35 // pred_fallthru
          _
        %s751 = sand.u32 %s156, 1
        %s752 = scalar_lea.sflag [#allocation4], %s751
        %s753 = sand.u32 %s156, 1
        %s754 = smul.addr %s753, 64
        %s755 = scalar_lea.vmem [#allocation7], %s754
        // Predicated region
        $region53: #{tpu_custom_call.1} parent=35 // pred_check
          %p756 = pneg %p166
        $region54: #{tpu_custom_call.1} parent=35 // pred_check_branch
          %758 = sbr.rel (%p756) target = $region56
        $region55: #{tpu_custom_call.1} parent=35 // pred_region
          %s759 = smul.u32 %s28, 2
          %s760 = sadd.s32 %s759, %s29
          %s761 = smul.u32 4, %s760
          %s763 = ssub.s32 1024, 1024
          %764 = vsyncadd %s752, %s763
          %s765 = smul.addr %s761, 2
          %s766 = smul.addr %s765, 128
          %s767 = scalar_lea.hbm %s4, %s766
          %s768 = sshll.u32 %s755, 4
          %s769 = int_to_ptr.vmem [resolvable:$true] %s768
          %774 = dma.vmem_to_hbm [thread:$0]  %s769, 1024, %s767, %s752, 128, 128, 8
        $region56: #{tpu_custom_call.1} parent=35 // pred_fallthru
          _
      $region36: #{tpu_custom_call.1} parent=5 // pred_fallthru
        _
      %p775 = scmp.le.s32.totalorder 2, %s19
      // Predicated region
      $region57: #{tpu_custom_call.1} parent=5 // pred_check
        %p776 = pneg %p775
      $region58: #{tpu_custom_call.1} parent=5 // pred_check_branch
        %778 = sbr.rel (%p776) target = $region60
      $region59: #{tpu_custom_call.1} parent=5 // pred_region
        %s779 = ssub.s32 %s19, 2
        // Predicated region
        $region61: #{tpu_custom_call.1} parent=59 // pred_check
          %p780 = pneg %p172
        $region62: #{tpu_custom_call.1} parent=59 // pred_check_branch
          %782 = sbr.rel (%p780) target = $region64
        $region63: #{tpu_custom_call.1} parent=59 // pred_region
          %s783 = sand.u32 %s157, 1
          %s784 = scalar_lea.sflag [#allocation4], %s783
          %s785 = sand.u32 %s157, 1
          %s786 = smul.addr %s785, 64
          %s787 = scalar_lea.vmem [#allocation7], %s786
          %788 = dma.done %s784, 1024
        $region64: #{tpu_custom_call.1} parent=59 // pred_fallthru
          _
      $region60: #{tpu_custom_call.1} parent=5 // pred_fallthru
        _
    $region6: #{tpu_custom_call.1} parent=1 // loop_footer
      %s23 = sadd.s32 1, %s19
    $region7: #{tpu_custom_call.1} parent=1 // loop_footer_branch
      %18 = sbr.rel target = $region3
    $region8: #{tpu_custom_call.1} parent=1 // loop_exit
      _
    %789 = vsyncpa [#allocation3], 1
    %s790 = scalar_lea.sflag [#allocation3], 1
    %791 = vsyncpa %s790, 1
    %792 = vsyncpa [#allocation6], 1
    %s793 = scalar_lea.sflag [#allocation6], 1
    %794 = vsyncpa %s793, 1
    %795 = vsyncpa [#allocation4], 1
    %s796 = scalar_lea.sflag [#allocation4], 1
    %797 = vsyncpa %s796, 1

</llo_original>
